<compile_context>
chip_gen: v7x
topology: tpu7x:2x2x1
jax: 0.10.0
libtpu: 0.0.40
codegen_flags: <defaults>
</compile_context>

<pallas_src>
import functools
import math

import jax
import jax.numpy as jnp
from jax.experimental import pallas as pl
from jax.experimental.pallas import tpu as pltpu


def _make_dense_kernel(x_ref, w_ref, o_ref, *, BB, C, G, H, W):
    """Fused conv3x3(pad=1, no bias) + ReLU + dense channel concat.

    x_ref: (BB*C,      H*W)   batch group of input planes (rows = (nb, c))
    w_ref: (BB*G, 9*BB*C)     block-diagonal conv weights (see wrapper)
    o_ref: (BB*(C+G),  H*W)   fused output (rows = (nb, [x-ch..., conv-ch...]))
    """
    HW = H * W
    f32 = jnp.float32

    x = x_ref[...].astype(f32)                                    # (BB*C, HW)

    # Lane-index masks implementing the zero padding of the 3x3 halo.
    lane = jax.lax.broadcasted_iota(jnp.int32, (1, HW), 1)
    colw = lane % W
    not_top = lane >= W                # kh=0 reads row r-1 (invalid at r == 0)
    not_bot = lane < (HW - W)          # kh=2 reads row r+1 (invalid at r == H-1)
    not_left = colw != 0               # kw=0 reads col j-1 (invalid at j == 0)
    not_right = colw != (W - 1)        # kw=2 reads col j+1 (invalid at j == W-1)

    # 9 taps via per-row circular lane rotation + masks. Any lane that wraps
    # around is always masked, so the roll reproduces zero padding exactly.
    taps = []
    for kh in range(3):
        for kw in range(3):
            d = (kh - 1) * W + (kw - 1)            # tap p reads x[p + d]
            t = x if d == 0 else pltpu.roll(x, shift=(-d) % HW, axis=1)
            m = None
            if kh == 0:
                m = not_top
            elif kh == 2:
                m = not_bot
            if kw == 0:
                m = not_left if m is None else jnp.logical_and(m, not_left)
            elif kw == 2:
                m = not_right if m is None else jnp.logical_and(m, not_right)
            if m is not None:
                t = jnp.where(m, t, 0.0)
            taps.append(t)
    # Rows ordered (tap, nb, c); each piece is 8-sublane aligned -> cheap concat.
    lhs = jnp.concatenate(taps, axis=0)                           # (9*BB*C, HW)

    # Single MXU matmul per grid step for the whole batch group, f32 accum.
    conv = jnp.dot(w_ref[...].astype(f32), lhs,
                   preferred_element_type=f32)                    # (BB*G, HW)
    conv = jnp.maximum(conv, 0.0).astype(o_ref.dtype)

    # Interleave [x, relu(conv)] per image into the fused output block.
    CG = C + G
    for nb in range(BB):                 # BB is small (bounded by the wrapper)
        o_ref[nb * CG:nb * CG + C, :] = x_ref[nb * C:(nb + 1) * C, :]
        o_ref[nb * CG + C:(nb + 1) * CG, :] = conv[nb * G:(nb + 1) * G, :]


def _pick_batch_block(N, C, G, HW, itemsize, *,
                      target_block_bytes=2 << 20, max_bb=16, deep_grid=8):
    """Images per grid step.

    Goals (per review):
      * BB*C and BB*(C+G) are multiples of 8 -> full 8x128 sublane tiles
        (else fall back to BB == N where blocks equal the full array dims).
      * Per-step in+out block <= ~target_block_bytes so double-buffered
        pipelining fits scoped VMEM on v5e/v6e/v7x.
      * Prefer >= deep_grid grid steps so DMA/writeback actually overlap.
      * Hard cap on BB (block-diagonal weight / store unroll grow with BB).
    """
    def unit(rows):
        return 8 // math.gcd(rows, 8)
    u_in, u_out = unit(C), unit(C + G)
    bb_unit = u_in * u_out // math.gcd(u_in, u_out)

    per_image_bytes = (2 * C + G) * HW * itemsize
    divisors = [d for d in range(1, N + 1) if N % d == 0]
    aligned = [d for d in divisors
               if d % bb_unit == 0 and d <= max(max_bb, bb_unit)]
    if not aligned:
        # TODO(synk): batch sizes with no 8-sublane-alignable divisor fall back
        # to a single full-array block; fine for small N, wasteful for huge N.
        return N
    fits = [d for d in aligned if d * per_image_bytes <= target_block_bytes]
    if not fits:
        return min(aligned)
    for min_steps in (deep_grid, 2, 1):
        cands = [d for d in fits if N // d >= min_steps]
        if cands:
            return max(cands)
    return max(fits)


def make_dense_forward(x_nchw, weight_oihw):
    """x: (N, C, H, W), weight: (G, C, 3, 3) -> concat([x, relu(conv3x3(x))], 1)."""
    N, C, H, W = x_nchw.shape
    G, C_w, KH, KW = weight_oihw.shape
    assert (C_w, KH, KW) == (C, 3, 3), "make_dense expects 3x3 conv weights"
    HW = H * W
    CG = C + G
    itemsize = jnp.dtype(x_nchw.dtype).itemsize

    BB = _pick_batch_block(N, C, G, HW, itemsize)
    grid_n = N // BB

    # Free, layout-preserving reshape: merge batch+channel into sublanes.
    x2d = x_nchw.reshape(N * C, HW)

    # Block-diagonal weights over the batch group:
    #   w_sel[(nb, g), (t, mb, c)] = w[g, c, kh, kw] * (nb == mb),  t = kh*3+kw
    # so one matmul computes the conv for every image in the group. Tiny array.
    w_t = jnp.transpose(weight_oihw, (2, 3, 0, 1)).reshape(9, G, C)   # (t, g, c)
    eye = jnp.eye(BB, dtype=weight_oihw.dtype)
    w_sel = jnp.einsum("tgc,nm->ngtmc", w_t, eye).reshape(BB * G, 9 * BB * C)

    # VMEM budget hint: double-buffered in/out blocks + weights + im2col temps.
    in_blk = BB * C * HW * itemsize
    out_blk = BB * CG * HW * itemsize
    w_bytes = int(w_sel.size) * jnp.dtype(w_sel.dtype).itemsize
    need = 2 * (in_blk + out_blk) + 2 * w_bytes + 12 * in_blk + (4 << 20)
    vmem_limit = int(min(max(need, 32 << 20), 48 << 20))

    # TODO(synk): for very large H*W additionally tile H into row bands
    # (multiple-of-8 height, +/-1 row halo); not needed at these sizes.
    kernel = functools.partial(_make_dense_kernel, BB=BB, C=C, G=G, H=H, W=W)

    out2d = pl.pallas_call(
        kernel,
        out_shape=jax.ShapeDtypeStruct((N * CG, HW), x_nchw.dtype),
        grid=(grid_n,),
        in_specs=[
            pl.BlockSpec((BB * C, HW), lambda n: (n, 0)),
            pl.BlockSpec((BB * G, 9 * BB * C), lambda n: (0, 0)),
        ],
        out_specs=pl.BlockSpec((BB * CG, HW), lambda n: (n, 0)),
        compiler_params=pltpu.CompilerParams(
            dimension_semantics=("parallel",),
            vmem_limit_bytes=vmem_limit,
        ),
    )(x2d, w_sel)

    # Free reshape back to NCHW -- no transpose, no extra concat pass.
    return out2d.reshape(N, CG, H, W)


def _reference(x_nchw, weight_oihw):
    conv = jax.lax.conv_general_dilated(
        x_nchw, weight_oihw, window_strides=(1, 1), padding="SAME",
        dimension_numbers=("NCHW", "OIHW", "NCHW"),
    )
    return jnp.concatenate([x_nchw, jax.nn.relu(conv)], axis=1)


if __name__ == "__main__":
    # make_dense(nChannels=4, growthRate=8, kernel_size=3)
    N, C, H, W = 2, 4, 16, 16
    G = 8

    key = jax.random.PRNGKey(0)
    kx, kw = jax.random.split(key)
    x = jax.random.normal(kx, (N, C, H, W), dtype=jnp.float32)
    # Deterministic kaiming-uniform-ish init for Conv2d weight (G, C, 3, 3).
    fan_in = C * 3 * 3
    bound = 1.0 / (fan_in ** 0.5)
    weight = jax.random.uniform(
        kw, (G, C, 3, 3), dtype=jnp.float32, minval=-bound, maxval=bound
    )

    out = jax.block_until_ready(make_dense_forward(x, weight))

    ref = _reference(x, weight)
    assert out.shape == (N, C + G, H, W), out.shape
    assert jnp.allclose(out, ref, atol=1e-4, rtol=1e-4), "mismatch vs reference"

    print("KERNEL_OK")
</pallas_src>

<mosaic_0001>
module attributes {stable_mosaic.version = 11 : i64} {
  func.func @_make_dense_kernel(%arg0: i32, %arg1: memref<8x256xf32, #tpu.memory_space<vmem>>, %arg2: memref<16x72xf32, #tpu.memory_space<vmem>>, %arg3: memref<24x256xf32, #tpu.memory_space<vmem>>) attributes {dimension_semantics = [#tpu.dimension_semantics<parallel>], iteration_bounds = array<i64: 1>, scalar_prefetch = 0 : i64, scratch_operands = 0 : i64, tpu.core_type = #tpu.core_type<tc>, window_params = [{transform_indices = @transform_0, window_bounds = array<i64: 8, 256>}, {pipeline_mode = #tpu.pipeline_mode<synchronous>, transform_indices = @transform_1, window_bounds = array<i64: 16, 72>}, {transform_indices = @transform_2, window_bounds = array<i64: 24, 256>}]} {
    %c0 = arith.constant 0 : index
    %c0_0 = arith.constant 0 : index
    %0 = vector.load %arg1[%c0, %c0_0] : memref<8x256xf32, #tpu.memory_space<vmem>>, vector<8x256xf32>
    %1 = tpu.iota {dimensions = array<i32: 1>} : vector<1x256xi32>
    %c16_i32 = arith.constant 16 : i32
    %c0_i32 = arith.constant 0 : i32
    %2 = arith.cmpi eq, %c16_i32, %c0_i32 : i32
    %c1_i32 = arith.constant 1 : i32
    %3 = arith.select %2, %c1_i32, %c16_i32 : i32
    %4 = vector.broadcast %3 : i32 to vector<1x256xi32>
    %5 = arith.remsi %1, %4 : vector<1x256xi32>
    %c0_i32_1 = arith.constant 0 : i32
    %6 = vector.broadcast %c0_i32_1 : i32 to vector<1x256xi32>
    %7 = arith.cmpi ne, %5, %6 : vector<1x256xi32>
    %c0_i32_2 = arith.constant 0 : i32
    %8 = vector.broadcast %c0_i32_2 : i32 to vector<1x256xi32>
    %9 = arith.cmpi slt, %5, %8 : vector<1x256xi32>
    %c0_i32_3 = arith.constant 0 : i32
    %10 = arith.cmpi slt, %3, %c0_i32_3 : i32
    %11 = vector.broadcast %10 : i1 to vector<1x256xi1>
    %12 = vector.broadcast %11 : vector<1x256xi1> to vector<1x256xi1>
    %13 = arith.xori %9, %12 : vector<1x256xi1>
    %14 = arith.andi %13, %7 : vector<1x256xi1>
    %15 = vector.broadcast %3 : i32 to vector<1x256xi32>
    %16 = arith.addi %5, %15 : vector<1x256xi32>
    %17 = arith.select %14, %16, %5 : vector<1x256xi1>, vector<1x256xi32>
    %c16_i32_4 = arith.constant 16 : i32
    %18 = vector.broadcast %c16_i32_4 : i32 to vector<1x256xi32>
    %19 = arith.cmpi sge, %1, %18 : vector<1x256xi32>
    %c240_i32 = arith.constant 240 : i32
    %20 = vector.broadcast %c240_i32 : i32 to vector<1x256xi32>
    %21 = arith.cmpi slt, %1, %20 : vector<1x256xi32>
    %c0_i32_5 = arith.constant 0 : i32
    %22 = vector.broadcast %c0_i32_5 : i32 to vector<1x256xi32>
    %23 = arith.cmpi ne, %17, %22 : vector<1x256xi32>
    %c15_i32 = arith.constant 15 : i32
    %24 = vector.broadcast %c15_i32 : i32 to vector<1x256xi32>
    %25 = arith.cmpi ne, %17, %24 : vector<1x256xi32>
    %c17_i32 = arith.constant 17 : i32
    %26 = tpu.dynamic_rotate %0 by %c17_i32 dim 1 : vector<8x256xf32>, i32 -> vector<8x256xf32>
    %27 = arith.andi %19, %23 : vector<1x256xi1>
    %cst = arith.constant 0.000000e+00 : f32
    %28 = vector.shape_cast %27 : vector<1x256xi1> to vector<1x256xi1>
    %29 = vector.broadcast %28 : vector<1x256xi1> to vector<8x256xi1>
    %30 = vector.broadcast %cst : f32 to vector<8x256xf32>
    %31 = arith.select %29, %26, %30 : vector<8x256xi1>, vector<8x256xf32>
    %c16_i32_6 = arith.constant 16 : i32
    %32 = tpu.dynamic_rotate %0 by %c16_i32_6 dim 1 : vector<8x256xf32>, i32 -> vector<8x256xf32>
    %cst_7 = arith.constant 0.000000e+00 : f32
    %33 = vector.shape_cast %19 : vector<1x256xi1> to vector<1x256xi1>
    %34 = vector.broadcast %33 : vector<1x256xi1> to vector<8x256xi1>
    %35 = vector.broadcast %cst_7 : f32 to vector<8x256xf32>
    %36 = arith.select %34, %32, %35 : vector<8x256xi1>, vector<8x256xf32>
    %c15_i32_8 = arith.constant 15 : i32
    %37 = tpu.dynamic_rotate %0 by %c15_i32_8 dim 1 : vector<8x256xf32>, i32 -> vector<8x256xf32>
    %38 = arith.andi %19, %25 : vector<1x256xi1>
    %cst_9 = arith.constant 0.000000e+00 : f32
    %39 = vector.shape_cast %38 : vector<1x256xi1> to vector<1x256xi1>
    %40 = vector.broadcast %39 : vector<1x256xi1> to vector<8x256xi1>
    %41 = vector.broadcast %cst_9 : f32 to vector<8x256xf32>
    %42 = arith.select %40, %37, %41 : vector<8x256xi1>, vector<8x256xf32>
    %c1_i32_10 = arith.constant 1 : i32
    %43 = tpu.dynamic_rotate %0 by %c1_i32_10 dim 1 : vector<8x256xf32>, i32 -> vector<8x256xf32>
    %cst_11 = arith.constant 0.000000e+00 : f32
    %44 = vector.shape_cast %23 : vector<1x256xi1> to vector<1x256xi1>
    %45 = vector.broadcast %44 : vector<1x256xi1> to vector<8x256xi1>
    %46 = vector.broadcast %cst_11 : f32 to vector<8x256xf32>
    %47 = arith.select %45, %43, %46 : vector<8x256xi1>, vector<8x256xf32>
    %c255_i32 = arith.constant 255 : i32
    %48 = tpu.dynamic_rotate %0 by %c255_i32 dim 1 : vector<8x256xf32>, i32 -> vector<8x256xf32>
    %cst_12 = arith.constant 0.000000e+00 : f32
    %49 = vector.shape_cast %25 : vector<1x256xi1> to vector<1x256xi1>
    %50 = vector.broadcast %49 : vector<1x256xi1> to vector<8x256xi1>
    %51 = vector.broadcast %cst_12 : f32 to vector<8x256xf32>
    %52 = arith.select %50, %48, %51 : vector<8x256xi1>, vector<8x256xf32>
    %c241_i32 = arith.constant 241 : i32
    %53 = tpu.dynamic_rotate %0 by %c241_i32 dim 1 : vector<8x256xf32>, i32 -> vector<8x256xf32>
    %54 = arith.andi %21, %23 : vector<1x256xi1>
    %cst_13 = arith.constant 0.000000e+00 : f32
    %55 = vector.shape_cast %54 : vector<1x256xi1> to vector<1x256xi1>
    %56 = vector.broadcast %55 : vector<1x256xi1> to vector<8x256xi1>
    %57 = vector.broadcast %cst_13 : f32 to vector<8x256xf32>
    %58 = arith.select %56, %53, %57 : vector<8x256xi1>, vector<8x256xf32>
    %c240_i32_14 = arith.constant 240 : i32
    %59 = tpu.dynamic_rotate %0 by %c240_i32_14 dim 1 : vector<8x256xf32>, i32 -> vector<8x256xf32>
    %cst_15 = arith.constant 0.000000e+00 : f32
    %60 = vector.shape_cast %21 : vector<1x256xi1> to vector<1x256xi1>
    %61 = vector.broadcast %60 : vector<1x256xi1> to vector<8x256xi1>
    %62 = vector.broadcast %cst_15 : f32 to vector<8x256xf32>
    %63 = arith.select %61, %59, %62 : vector<8x256xi1>, vector<8x256xf32>
    %c239_i32 = arith.constant 239 : i32
    %64 = tpu.dynamic_rotate %0 by %c239_i32 dim 1 : vector<8x256xf32>, i32 -> vector<8x256xf32>
    %65 = arith.andi %21, %25 : vector<1x256xi1>
    %cst_16 = arith.constant 0.000000e+00 : f32
    %66 = vector.shape_cast %65 : vector<1x256xi1> to vector<1x256xi1>
    %67 = vector.broadcast %66 : vector<1x256xi1> to vector<8x256xi1>
    %68 = vector.broadcast %cst_16 : f32 to vector<8x256xf32>
    %69 = arith.select %67, %64, %68 : vector<8x256xi1>, vector<8x256xf32>
    %70 = tpu.concatenate %31, %36, %42, %47, %0, %52, %58, %63, %69 in 0 : vector<8x256xf32>, vector<8x256xf32>, vector<8x256xf32>, vector<8x256xf32>, vector<8x256xf32>, vector<8x256xf32>, vector<8x256xf32>, vector<8x256xf32>, vector<8x256xf32> -> vector<72x256xf32>
    %c0_17 = arith.constant 0 : index
    %c0_18 = arith.constant 0 : index
    %71 = vector.load %arg2[%c0_17, %c0_18] : memref<16x72xf32, #tpu.memory_space<vmem>>, vector<16x72xf32>
    %cst_19 = arith.constant dense<0.000000e+00> : vector<16x256xf32>
    %72 = tpu.matmul %71, %70, %cst_19 {dimension_numbers = #tpu.dot_dimension_numbers<[1], [0], [0], [1], [0, 0, 1, 1], [], []>} : vector<16x72xf32>, vector<72x256xf32>, vector<16x256xf32> -> vector<16x256xf32>
    %cst_20 = arith.constant 0.000000e+00 : f32
    %73 = vector.broadcast %cst_20 : f32 to vector<16x256xf32>
    %74 = arith.maximumf %72, %73 : vector<16x256xf32>
    %c0_21 = arith.constant 0 : index
    %c0_22 = arith.constant 0 : index
    %75 = vector.load %arg1[%c0_21, %c0_22] : memref<8x256xf32, #tpu.memory_space<vmem>>, vector<4x256xf32>
    %c0_23 = arith.constant 0 : index
    %c0_24 = arith.constant 0 : index
    %76 = vector.load %arg3[%c0_23, %c0_24] : memref<24x256xf32, #tpu.memory_space<vmem>>, vector<4x256xf32>
    tpu.vector_store %arg3[%c0_23, %c0_24], %75 {strides = array<i32>} : memref<24x256xf32, #tpu.memory_space<vmem>>, vector<4x256xf32>,
    %77 = vector.extract_strided_slice %74 {offsets = [0, 0], sizes = [8, 256], strides = [1, 1]} : vector<16x256xf32> to vector<8x256xf32>
    %c4 = arith.constant 4 : index
    %c0_25 = arith.constant 0 : index
    %78 = vector.load %arg3[%c4, %c0_25] : memref<24x256xf32, #tpu.memory_space<vmem>>, vector<8x256xf32>
    tpu.vector_store %arg3[%c4, %c0_25], %77 {strides = array<i32>} : memref<24x256xf32, #tpu.memory_space<vmem>>, vector<8x256xf32>,
    %c4_26 = arith.constant 4 : index
    %c0_27 = arith.constant 0 : index
    %79 = vector.load %arg1[%c4_26, %c0_27] : memref<8x256xf32, #tpu.memory_space<vmem>>, vector<4x256xf32>
    %c12 = arith.constant 12 : index
    %c0_28 = arith.constant 0 : index
    %80 = vector.load %arg3[%c12, %c0_28] : memref<24x256xf32, #tpu.memory_space<vmem>>, vector<4x256xf32>
    tpu.vector_store %arg3[%c12, %c0_28], %79 {strides = array<i32>} : memref<24x256xf32, #tpu.memory_space<vmem>>, vector<4x256xf32>,
    %81 = vector.extract_strided_slice %74 {offsets = [8, 0], sizes = [8, 256], strides = [1, 1]} : vector<16x256xf32> to vector<8x256xf32>
    %c16 = arith.constant 16 : index
    %c0_29 = arith.constant 0 : index
    %82 = vector.load %arg3[%c16, %c0_29] : memref<24x256xf32, #tpu.memory_space<vmem>>, vector<8x256xf32>
    tpu.vector_store %arg3[%c16, %c0_29], %81 {strides = array<i32>} : memref<24x256xf32, #tpu.memory_space<vmem>>, vector<8x256xf32>,
    return
  }
  func.func @transform_0(%arg0: i32) -> (i32, i32) {
    %c0_i32 = arith.constant 0 : i32
    %c0_i32_0 = arith.constant 0 : i32
    return %arg0, %c0_i32 : i32, i32
  }
  func.func @transform_1(%arg0: i32) -> (i32, i32) {
    %c0_i32 = arith.constant 0 : i32
    %c0_i32_0 = arith.constant 0 : i32
    %c0_i32_1 = arith.constant 0 : i32
    return %c0_i32, %c0_i32_0 : i32, i32
  }
  func.func @transform_2(%arg0: i32) -> (i32, i32) {
    %c0_i32 = arith.constant 0 : i32
    %c0_i32_0 = arith.constant 0 : i32
    return %arg0, %c0_i32 : i32, i32
  }
}

</mosaic_0001>

<llo_original>
// kernel: tpu_custom_call.1
$region0: #{tpu_custom_call.1}
  #allocation0 [shape = 'u32[]', space=smem, size = 0x4, offset = 0x4, fixed_abs, tag = 'smem constant byte address 0x4 - core index']
  #allocation1 [shape = 'u32[144,128]{1,0:T(1,128)}', space=vmem, size = 0x12000, scoped, tag = 'internal scratch']
  %s0 = inlined_call_operand.hbm [shape: f32[8,256], index: 0, kind: input, shape index: {}]
  %s1 = inlined_call_operand.hbm [shape: f32[16,72], index: 1, kind: input, shape index: {}]
  %s2 = inlined_call_operand.hbm [shape: f32[24,256], index: 2, kind: output, shape index: {}]
  %s3 = sld [smem:[#allocation0]]
  $region26: #{tpu_custom_call.1} parent=0
    _
  %s5 = ssub.s32 1, %s3
  %s6 = scalar_select 0, %s5, %s3
  $region1: #{tpu_custom_call.1} parent=0
    #allocation2 [shape = 'u8[8192]{0}', space=vmem, size = 0x2000, scoped, tag = 'input window, operand 0, single buffered']
    #allocation3 [shape = 's32[1]{0}', space=sflag, size = 0x4, scoped, tag = 'scoped memory for tpu_custom_call.1']
    #allocation4 [shape = 's32[1]{0}', space=sflag, size = 0x4, scoped, tag = 'scoped memory for tpu_custom_call.1']
    #allocation5 [shape = 'u8[8192]{0}', space=vmem, size = 0x2000, scoped, tag = 'input window, operand 1, single buffered']
    #allocation6 [shape = 's32[1]{0}', space=sflag, size = 0x4, scoped, tag = 'scoped memory for tpu_custom_call.1']
    #allocation7 [shape = 'u8[24576]{0}', space=vmem, size = 0x6000, scoped, tag = 'output window, operand 0, single buffered']
    %7 = vsyncpa [#allocation3], 0
    %8 = vsyncpa [#allocation6], 0
    %9 = vsyncpa [#allocation4], 0
    // Predicated region
    $region2: #{tpu_custom_call.1} parent=1 // pred_check
      _
    $region3: #{tpu_custom_call.1} parent=1 // pred_check_branch
      %11 = sbr.rel (0) target = $region5
    $region4: #{tpu_custom_call.1} parent=1 // pred_region
      %s13 = ssub.s32 256, 256
      %14 = vsyncadd [#allocation3], %s13
      %s16 = sshll.u32 [#allocation2], 4
      %s17 = int_to_ptr.vmem [resolvable:$true] %s16
      %19 = dma.hbm_to_vmem [thread:$0]  %s0, 256, %s17, [#allocation3]
    $region5: #{tpu_custom_call.1} parent=1 // pred_fallthru
      _
    // Predicated region
    $region6: #{tpu_custom_call.1} parent=1 // pred_check
      _
    $region7: #{tpu_custom_call.1} parent=1 // pred_check_branch
      %21 = sbr.rel (0) target = $region9
    $region8: #{tpu_custom_call.1} parent=1 // pred_region
      %s23 = ssub.s32 256, 256
      %24 = vsyncadd [#allocation6], %s23
      %s25 = sshll.u32 [#allocation5], 4
      %s26 = int_to_ptr.vmem [resolvable:$true] %s25
      %31 = dma.hbm_to_vmem [thread:$0]  %s1, 256, %s26, [#allocation6], 128, 128, 8
    $region9: #{tpu_custom_call.1} parent=1 // pred_fallthru
      _
    // Predicated region
    $region10: #{tpu_custom_call.1} parent=1 // pred_check
      _
    $region11: #{tpu_custom_call.1} parent=1 // pred_check_branch
      %33 = sbr.rel (0) target = $region13
    $region12: #{tpu_custom_call.1} parent=1 // pred_region
      %34 = dma.done [#allocation3], 256
    $region13: #{tpu_custom_call.1} parent=1 // pred_fallthru
      _
    // Predicated region
    $region14: #{tpu_custom_call.1} parent=1 // pred_check
      _
    $region15: #{tpu_custom_call.1} parent=1 // pred_check_branch
      %36 = sbr.rel (0) target = $region17
    $region16: #{tpu_custom_call.1} parent=1 // pred_region
      %37 = dma.done [#allocation6], 256
    $region17: #{tpu_custom_call.1} parent=1 // pred_fallthru
      _
    %v38 = vld [vmem:[#allocation2] sm:$0xff]
    %v39 = vld [vmem:[#allocation2 + $0x8] sm:$0xff]
    %v40 = vlaneseq
    %v41 = vand.u32 %v40, 127
    %v42 = vadd.s32 %v41, 128
    %vm43 = vcmp.lt.s32.totalorder %v41, 0
    %v44 = vsub.s32 0, %v41
    %v45 = vsel %vm43, %v44, %v41
    %v46 = vshrl.u32 %v45, 4
    %v47 = vand.u32 %v45, 15
    %v48 = vsub.s32 0, %v47
    %v49 = vsel %vm43, %v48, %v47
    %vm50 = vcmp.lt.s32.totalorder %v42, 0
    %v51 = vsub.s32 0, %v42
    %v52 = vsel %vm50, %v51, %v42
    %v53 = vshrl.u32 %v52, 4
    %v54 = vand.u32 %v52, 15
    %v55 = vsub.s32 0, %v54
    %v56 = vsel %vm50, %v55, %v54
    %vm57 = vcmp.ne.s32.totalorder %v49, 0
    %vm58 = vcmp.ne.s32.totalorder %v56, 0
    %vm59 = vcmp.lt.s32.totalorder %v49, 0
    %vm60 = vcmp.lt.s32.totalorder %v56, 0
    %vm61 = vmand %vm59, %vm57
    %vm62 = vmand %vm60, %vm58
    %v63 = vadd.s32 %v49, 16
    %v64 = vadd.s32 %v56, 16
    %v65 = vsel %vm61, %v63, %v49
    %v66 = vsel %vm62, %v64, %v56
    %vm67 = vcmp.ge.s32.totalorder %v41, 16
    %vm68 = vcmp.ge.s32.totalorder %v42, 16
    %vm69 = vcmp.lt.s32.totalorder %v41, 240
    %vm70 = vcmp.lt.s32.totalorder %v42, 240
    %vm71 = vcmp.ne.s32.totalorder %v65, 0
    %vm72 = vcmp.ne.s32.totalorder %v66, 0
    %vm73 = vcmp.ne.s32.totalorder %v65, 15
    %vm74 = vcmp.ne.s32.totalorder %v66, 15
    %75 = vrot.lane.b32.xlu0 %v38, 17
    %v76 = vpop.permute.xlu0 %75
    %77 = vrot.lane.b32.xlu0 %v39, 17
    %v78 = vpop.permute.xlu0 %77
    %vm79 = vcmp.lt.s32.totalorder %v41, 17
    %v80 = vsel %vm79, %v76, %v78
    %v81 = vsel %vm79, %v78, %v76
    %vm82 = vmand %vm67, %vm71
    %vm83 = vmand %vm68, %vm72
    %v84 = vsel %vm82, 1, 0
    %v85 = vsel %vm83, 1, 0
    %vm86 = vcmp.eq.s32.totalorder %v84, 1
    %vm87 = vcmp.eq.s32.totalorder %v85, 1
    %v88 = vsel %vm86, %v81, 0.0
    %v89 = vsel %vm87, %v80, 0.0
    %90 = vrot.lane.b32.xlu0 %v38, 16
    %v91 = vpop.permute.xlu0 %90
    %92 = vrot.lane.b32.xlu0 %v39, 16
    %v93 = vpop.permute.xlu0 %92
    %vm94 = vcmp.lt.s32.totalorder %v41, 16
    %v95 = vsel %vm94, %v91, %v93
    %v96 = vsel %vm94, %v93, %v91
    %v97 = vsel %vm67, 1, 0
    %v98 = vsel %vm68, 1, 0
    %vm99 = vcmp.eq.s32.totalorder %v97, 1
    %vm100 = vcmp.eq.s32.totalorder %v98, 1
    %v101 = vsel %vm99, %v96, 0.0
    %v102 = vsel %vm100, %v95, 0.0
    %103 = vrot.lane.b32.xlu0 %v38, 15
    %v104 = vpop.permute.xlu0 %103
    %105 = vrot.lane.b32.xlu0 %v39, 15
    %v106 = vpop.permute.xlu0 %105
    %vm107 = vcmp.lt.s32.totalorder %v41, 15
    %v108 = vsel %vm107, %v104, %v106
    %v109 = vsel %vm107, %v106, %v104
    %vm110 = vmand %vm67, %vm73
    %vm111 = vmand %vm68, %vm74
    %v112 = vsel %vm110, 1, 0
    %v113 = vsel %vm111, 1, 0
    %vm114 = vcmp.eq.s32.totalorder %v112, 1
    %vm115 = vcmp.eq.s32.totalorder %v113, 1
    %v116 = vsel %vm114, %v109, 0.0
    %v117 = vsel %vm115, %v108, 0.0
    %118 = vrot.lane.b32.xlu0 %v38, 1
    %v119 = vpop.permute.xlu0 %118
    %120 = vrot.lane.b32.xlu0 %v39, 1
    %v121 = vpop.permute.xlu0 %120
    %vm122 = vcmp.lt.s32.totalorder %v41, 1
    %v123 = vsel %vm122, %v119, %v121
    %v124 = vsel %vm122, %v121, %v119
    %v125 = vsel %vm71, 1, 0
    %v126 = vsel %vm72, 1, 0
    %vm127 = vcmp.eq.s32.totalorder %v125, 1
    %vm128 = vcmp.eq.s32.totalorder %v126, 1
    %v129 = vsel %vm127, %v124, 0.0
    %v130 = vsel %vm128, %v123, 0.0
    %131 = vrot.lane.b32.xlu0 %v38, 127
    %v132 = vpop.permute.xlu0 %131
    %133 = vrot.lane.b32.xlu0 %v39, 127
    %v134 = vpop.permute.xlu0 %133
    %vm135 = vcmp.lt.s32.totalorder %v41, 127
    %v136 = vsel %vm135, %v132, %v134
    %v137 = vsel %vm135, %v134, %v132
    %v138 = vsel %vm73, 1, 0
    %v139 = vsel %vm74, 1, 0
    %vm140 = vcmp.eq.s32.totalorder %v138, 1
    %vm141 = vcmp.eq.s32.totalorder %v139, 1
    %v142 = vsel %vm140, %v136, 0.0
    %v143 = vsel %vm141, %v137, 0.0
    %144 = vrot.lane.b32.xlu0 %v38, 113
    %v145 = vpop.permute.xlu0 %144
    %146 = vrot.lane.b32.xlu0 %v39, 113
    %v147 = vpop.permute.xlu0 %146
    %vm148 = vcmp.lt.s32.totalorder %v41, 113
    %v149 = vsel %vm148, %v145, %v147
    %v150 = vsel %vm148, %v147, %v145
    %vm151 = vmand %vm69, %vm71
    %vm152 = vmand %vm70, %vm72
    %v153 = vsel %vm151, 1, 0
    %v154 = vsel %vm152, 1, 0
    %vm155 = vcmp.eq.s32.totalorder %v153, 1
    %vm156 = vcmp.eq.s32.totalorder %v154, 1
    %v157 = vsel %vm155, %v149, 0.0
    %v158 = vsel %vm156, %v150, 0.0
    %159 = vrot.lane.b32.xlu0 %v38, 112
    %v160 = vpop.permute.xlu0 %159
    %161 = vrot.lane.b32.xlu0 %v39, 112
    %v162 = vpop.permute.xlu0 %161
    %vm163 = vcmp.lt.s32.totalorder %v41, 112
    %v164 = vsel %vm163, %v160, %v162
    %v165 = vsel %vm163, %v162, %v160
    %v166 = vsel %vm69, 1, 0
    %v167 = vsel %vm70, 1, 0
    %vm168 = vcmp.eq.s32.totalorder %v166, 1
    %vm169 = vcmp.eq.s32.totalorder %v167, 1
    %v170 = vsel %vm168, %v164, 0.0
    %v171 = vsel %vm169, %v165, 0.0
    %172 = vrot.lane.b32.xlu0 %v38, 111
    %v173 = vpop.permute.xlu0 %172
    %174 = vrot.lane.b32.xlu0 %v39, 111
    %v175 = vpop.permute.xlu0 %174
    %vm176 = vcmp.lt.s32.totalorder %v41, 111
    %v177 = vsel %vm176, %v173, %v175
    %v178 = vsel %vm176, %v175, %v173
    %vm179 = vmand %vm69, %vm73
    %vm180 = vmand %vm70, %vm74
    %v181 = vsel %vm179, 1, 0
    %v182 = vsel %vm180, 1, 0
    %vm183 = vcmp.eq.s32.totalorder %v181, 1
    %vm184 = vcmp.eq.s32.totalorder %v182, 1
    %v185 = vsel %vm183, %v177, 0.0
    %v186 = vsel %vm184, %v178, 0.0
    %v187 = vld [vmem:[#allocation5] sm:$0xff]
    %v188 = vld [vmem:[#allocation5 + $0x8] sm:$0xff]
    %vm189 = vcmask 588800
    %v191 = vsel %vm189, %v187, 0
    %v194 = vsel %vm189, %v188, 0
    %196 = vmatprep.subr.mxu0 %v89
    %197 = vmatpush1.msra.mxu0 %v88
    %198 = vmatprep.subr.mxu0 %v102
    %199 = vmatpush1.msra.mxu0 %v101
    %200 = vmatprep.subr.mxu0 %v117
    %201 = vmatpush1.msra.mxu0 %v116
    %202 = vmatprep.subr.mxu0 %v130
    %203 = vmatpush1.msra.mxu0 %v129
    %204 = vmatprep.subr.mxu0 %v39
    %205 = vmatpush1.msra.mxu0 %v38
    %206 = vmatprep.subr.mxu0 %v143
    %207 = vmatpush1.msra.mxu0 %v142
    %208 = vmatprep.subr.mxu0 %v158
    %209 = vmatpush1.msra.mxu0 %v157
    %210 = vmatprep.subr.mxu0 %v171
    %211 = vmatpush1.msra.mxu0 %v170
    %212 = vmatprep.subr.mxu0 %v186
    %213 = vmatpush1.msra.mxu0 %v185
    %214 = vmatprep.subr.mxu0 0.0
    %215 = vmatpush1.msra.mxu0 0.0
    %216 = vmatprep.subr.mxu0 0.0
    %217 = vmatpush1.msra.mxu0 0.0
    %218 = vmatprep.subr.mxu0 0.0
    %219 = vmatpush1.msra.mxu0 0.0
    %220 = vmatprep.subr.mxu0 0.0
    %221 = vmatpush1.msra.mxu0 0.0
    %222 = vmatprep.subr.mxu0 0.0
    %223 = vmatpush1.msra.mxu0 0.0
    %224 = vmatprep.subr.mxu0 0.0
    %225 = vmatpush1.msra.mxu0 0.0
    %226 = vmatprep.subr.mxu0 0.0
    %227 = vmatpush1.msra.mxu0 0.0
    %228 = vmatprep.subr.mxu0 0.0
    %229 = vmatpush1.msra.mxu0 0.0
    %230 = vmatprep.subr.mxu0 0.0
    %231 = vmatpush1.msra.mxu0 0.0
    %232 = vmatprep.subr.mxu0 0.0
    %233 = vmatpush1.msra.mxu0 0.0
    %234 = vmatprep.subr.mxu0 0.0
    %235 = vmatpush1.msra.mxu0 0.0
    %236 = vmatprep.subr.mxu0 0.0
    %237 = vmatpush1.msra.mxu0 0.0
    %238 = vmatprep.subr.mxu0 0.0
    %239 = vmatpush1.msra.mxu0 0.0
    %240 = vmatprep.subr.mxu0 0.0
    %241 = vmatpush1.msra.mxu0 0.0
    %242 = vmatprep.subr.mxu0 0.0
    %243 = vmatpush1.msra.mxu0 0.0
    %244 = vmatprep.subr.mxu0 0.0
    %245 = vmatpush1.msra.mxu0 0.0
    %246 = vmatprep.subr.mxu0 0.0
    %247 = vmatpush1.msra.mxu0 0.0
    %248 = vmatprep.subr.mxu0 0.0
    %249 = vmatpush1.msra.mxu0 0.0
    %250 = vmatprep.subr.mxu0 0.0
    %251 = vmatpush1.msra.mxu0 0.0
    %252 = vmatprep.subr.mxu0 0.0
    %253 = vmatpush1.msra.mxu0 0.0
    %254 = vmatprep.subr.mxu0 0.0
    %255 = vmatpush1.msra.mxu0 0.0
    %256 = vmatprep.subr.mxu0 0.0
    %257 = vmatpush1.msra.mxu0 0.0
    %258 = vmatprep.subr.mxu0 0.0
    %259 = vmatpush1.msra.mxu0 0.0
    %260 = vmatprep.mubr.f32.mxu0 0.0
    %261 = vmatmul.mubr.f32.gmra.mrb[0].mxu0 %v191
    %v262 = vpop.f32.mrb[0].mxu0
    %v263 = vadd.f32 0.0, %v262
    %v264 = vpop.f32.mrb[0].mxu0
    %v265 = vadd.f32 0.0, %v264
    %266 = vmatprep.mubr.f32.mxu0 0.0
    %267 = vmatmul.mubr.f32.gmra.mrb[0].mxu0 %v194
    %v268 = vpop.f32.mrb[0].mxu0
    %v269 = vadd.f32 0.0, %v268
    %v270 = vpop.f32.mrb[0].mxu0
    %v271 = vadd.f32 0.0, %v270
    %272 = vdwg.mxu0
    %v273 = vmax.f32 %v263, 0.0
    %v274 = vmax.f32 %v265, 0.0
    %v275 = vmax.f32 %v269, 0.0
    %v276 = vmax.f32 %v271, 0.0
    %v277 = vld [vmem:[#allocation2] sm:$0xf]
    %v278 = vld [vmem:[#allocation2 + $0x8] sm:$0xf]
    %279 = vst [vmem:[#allocation7] sm:$0xf] %v277
    %280 = vst [vmem:[#allocation7 + $0x8] sm:$0xf] %v278
    %v283 = vrot.slane %v273, 4
    %v284 = vrot.slane %v274, 4
    %287 = vst [vmem:[#allocation7] sm:$0xf0] %v283
    %288 = vst [vmem:[#allocation7 + $0x8] sm:$0xf0] %v284
    %289 = vst [vmem:[#allocation7 + $0x10] sm:$0xf] %v283
    %290 = vst [vmem:[#allocation7 + $0x18] sm:$0xf] %v284
    %v291 = vld [vmem:[#allocation2] sm:$0xf0]
    %v292 = vld [vmem:[#allocation2 + $0x8] sm:$0xf0]
    %293 = vst [vmem:[#allocation7 + $0x10] sm:$0xf0] %v291
    %294 = vst [vmem:[#allocation7 + $0x18] sm:$0xf0] %v292
    %295 = vst [vmem:[#allocation7 + $0x20] sm:$0xff] %v275
    %296 = vst [vmem:[#allocation7 + $0x28] sm:$0xff] %v276
    // Predicated region
    $region18: #{tpu_custom_call.1} parent=1 // pred_check
      _
    $region19: #{tpu_custom_call.1} parent=1 // pred_check_branch
      %298 = sbr.rel (0) target = $region21
    $region20: #{tpu_custom_call.1} parent=1 // pred_region
      %s300 = ssub.s32 768, 768
      %301 = vsyncadd [#allocation4], %s300
      %s302 = sshll.u32 [#allocation7], 4
      %s303 = int_to_ptr.vmem [resolvable:$true] %s302
      %308 = dma.vmem_to_hbm [thread:$0]  %s303, 768, %s2, [#allocation4], 256, 256, 16
    $region21: #{tpu_custom_call.1} parent=1 // pred_fallthru
      _
    // Predicated region
    $region22: #{tpu_custom_call.1} parent=1 // pred_check
      _
    $region23: #{tpu_custom_call.1} parent=1 // pred_check_branch
      %310 = sbr.rel (0) target = $region25
    $region24: #{tpu_custom_call.1} parent=1 // pred_region
      %311 = dma.done [#allocation4], 768
    $region25: #{tpu_custom_call.1} parent=1 // pred_fallthru
      _
    %312 = vsyncpa [#allocation3], 1
    %313 = vsyncpa [#allocation6], 1
    %314 = vsyncpa [#allocation4], 1

</llo_original>
